<compile_context>
chip_gen: v7x
topology: tpu7x:2x2x1
jax: 0.10.0
libtpu: 0.0.40
codegen_flags: <defaults>
</compile_context>

<pallas_src>
import functools
import math

import jax
import jax.numpy as jnp
from jax import lax
from jax.experimental import pallas as pl
from jax.experimental.pallas import tpu as pltpu

_LANE = 128
_NEG_INF = -1e30  # finite sentinel: fully-masked rows give uniform attention, not NaN


def _pick_tile(s):
    """Largest sequence tile out of (512, 256, 128) dividing s, else full s."""
    for c in (512, 256, 128):
        if s >= c and s % c == 0:
            return c
    return s


def _vmem_limit_bytes():
    # Re-derive the VMEM budget per TPU generation (v7x: 64 MiB physical,
    # v5e/v6e: 128 MiB) and leave ~40% headroom for compiler scratch / DMA buffers.
    try:
        cap = int(pltpu.get_tpu_info().vmem_capacity_bytes)
    except Exception:
        cap = 64 * 1024 * 1024
    return min(int(cap * 0.6), 80 * 1024 * 1024)


# ---------------------------------------------------------------------------
# Kernel: per-(batch, S_q tile, kv-group) QKV projection + flash attention +
# accumulated (fused) output projection.
# ---------------------------------------------------------------------------
def _gqa_kernel(x_ref, bias_ref, wq_ref, bq_ref, wkv_ref, bkv_ref, wo_ref,
                bo_ref, o_ref, acc_ref, *, group_size, pad_hd, tk, num_k_tiles):
    g = pl.program_id(2)
    tq = acc_ref.shape[0]
    P = pad_hd

    @pl.when(g == 0)
    def _():
        acc_ref[...] = jnp.zeros_like(acc_ref)

    # --- Q projection for this group's heads (scale pre-folded into wq/bq) ----
    q_start = pl.multiple_of(pl.program_id(1) * tq, tq)
    x_q = x_ref[0, pl.ds(q_start, tq), :]                         # [TQ, H] bf16
    q_all = (jnp.dot(x_q, wq_ref[0], preferred_element_type=jnp.float32)
             + bq_ref[0]).astype(jnp.bfloat16)                    # [TQ, gs*P]

    # --- flash-style loop over S_k tiles (K/V projected per tile) -------------
    def k_tile_step(k_start, carry):
        x_kv = x_ref[0, pl.ds(k_start, tk), :]                    # [TK, H] bf16
        kv = (jnp.dot(x_kv, wkv_ref[0], preferred_element_type=jnp.float32)
              + bkv_ref[0])                                       # [TK, 2P] f32
        k_t = kv[:, :P].astype(jnp.bfloat16)
        v_t = kv[:, P:].astype(jnp.bfloat16)
        bias_t = bias_ref[0, :, pl.ds(k_start, tk)]               # [1, TK] additive

        new_carry = []
        for j in range(group_size):                   # static unroll over heads
            m_j, l_j, ctx_j = carry[j]
            q_j = q_all[:, j * P:(j + 1) * P]                     # lane-aligned view
            s = lax.dot_general(q_j, k_t, (((1,), (1,)), ((), ())),
                                preferred_element_type=jnp.float32)   # [TQ, TK]
            s = s + bias_t
            m_new = jnp.maximum(m_j, jnp.max(s, axis=-1, keepdims=True))
            alpha = jnp.exp(m_j - m_new)
            p = jnp.exp(s - m_new)                                # unnormalized probs
            l_new = alpha * l_j + jnp.sum(p, axis=-1, keepdims=True)
            ctx_new = alpha * ctx_j + jnp.dot(p.astype(jnp.bfloat16), v_t,
                                              preferred_element_type=jnp.float32)
            new_carry.append((m_new, l_new, ctx_new))
        return tuple(new_carry)

    init = tuple((jnp.full((tq, 1), _NEG_INF, jnp.float32),
                  jnp.zeros((tq, 1), jnp.float32),
                  jnp.zeros((tq, P), jnp.float32)) for _ in range(group_size))

    if num_k_tiles == 1:
        final = k_tile_step(0, init)                              # static path
    else:
        final = lax.fori_loop(
            0, num_k_tiles,
            lambda t, c: k_tile_step(pl.multiple_of(t * tk, tk), c),
            init, unroll=num_k_tiles <= 4)

    # --- deferred softmax normalization + fused per-head output projection ----
    for j in range(group_size):
        _, l_j, ctx_j = final[j]
        ctx_n = ctx_j * pl.reciprocal(l_j, approx=True)           # [TQ, P] mul only
        acc_ref[...] += jnp.dot(ctx_n.astype(jnp.bfloat16),
                                wo_ref[0, j * P:(j + 1) * P, :],
                                preferred_element_type=jnp.float32)
        # TODO(synk): dropout on attention weights is a no-op (module default 0.0).

    @pl.when(g == pl.num_programs(2) - 1)
    def _():
        o_ref[0] = (acc_ref[...] + bo_ref[...]).astype(o_ref.dtype)


# ---------------------------------------------------------------------------
# One-time weight packing (outside the per-call path): lane-aligned head slabs,
# attention scale folded into Q weights/bias, bf16 MXU operands.
# ---------------------------------------------------------------------------
def pack_gqa_params(params, *, num_heads, group_size):
    Wq, bq, Wk, bk, Wv, bv, Wo, bo = params
    H = Wq.shape[1]
    assert H % num_heads == 0 and num_heads % group_size == 0
    hd = H // num_heads
    gn = num_heads // group_size
    P = ((hd + _LANE - 1) // _LANE) * _LANE       # lane-aligned head slab width
    scale = 1.0 / math.sqrt(hd)

    def pad_last(a, width):
        if a.shape[-1] == width:
            return a
        return jnp.pad(a, [(0, 0)] * (a.ndim - 1) + [(0, width - a.shape[-1])])

    # Q: nn.Linear rows (head*hd + d) -> packed columns (head_in_group*P + d).
    wq = jnp.transpose((Wq * scale).reshape(num_heads, hd, H), (0, 2, 1))   # [nh,H,hd]
    wq = pad_last(wq, P).reshape(gn, group_size, H, P)
    wq = jnp.transpose(wq, (0, 2, 1, 3)).reshape(gn, H, group_size * P)
    bq_p = pad_last((bq * scale).reshape(num_heads, hd), P)
    bq_p = bq_p.reshape(gn, 1, group_size * P)

    # K / V: one [K | V] slab per group.
    wk = pad_last(jnp.transpose(Wk.reshape(gn, hd, H), (0, 2, 1)), P)       # [gn,H,P]
    wv = pad_last(jnp.transpose(Wv.reshape(gn, hd, H), (0, 2, 1)), P)
    wkv = jnp.concatenate([wk, wv], axis=-1)                                # [gn,H,2P]
    bkv = jnp.concatenate([pad_last(bk.reshape(gn, 1, hd), P),
                           pad_last(bv.reshape(gn, 1, hd), P)], axis=-1)

    # Output projection: rows of Wo.T grouped per (group, head), zero-padded rows.
    wo = Wo.T.reshape(num_heads, hd, H)
    if P != hd:
        wo = jnp.pad(wo, ((0, 0), (0, P - hd), (0, 0)))
    wo = wo.reshape(gn, group_size * P, H)

    return dict(
        wq=wq.astype(jnp.bfloat16), bq=bq_p.astype(jnp.float32),
        wkv=wkv.astype(jnp.bfloat16), bkv=bkv.astype(jnp.float32),
        wo=wo.astype(jnp.bfloat16), bo=bo.reshape(1, H).astype(jnp.float32),
        num_heads=num_heads, group_size=group_size, group_num=gn,
        head_dim=hd, pad_hd=P, hidden_size=H)


# ---------------------------------------------------------------------------
# Forward wrapper
# ---------------------------------------------------------------------------
def grouped_query_attention(hidden_state, packed, attention_mask=None):
    B, S, H = hidden_state.shape
    assert H == packed["hidden_size"]
    gs = packed["group_size"]
    gn = packed["group_num"]
    P = packed["pad_hd"]

    tq = _pick_tile(S)
    tk = _pick_tile(S)
    num_sq = S // tq
    num_kt = S // tk
    qw = gs * P

    x_bf = hidden_state.astype(jnp.bfloat16)
    if attention_mask is None:
        bias = jnp.zeros((B, 1, S), jnp.float32)
    else:
        bias = jnp.where(attention_mask.reshape(B, 1, S) == 0,
                         _NEG_INF, 0.0).astype(jnp.float32)

    kernel = functools.partial(_gqa_kernel, group_size=gs, pad_hd=P,
                               tk=tk, num_k_tiles=num_kt)

    return pl.pallas_call(
        kernel,
        out_shape=jax.ShapeDtypeStruct((B, S, H), hidden_state.dtype),
        grid_spec=pltpu.PrefetchScalarGridSpec(
            num_scalar_prefetch=0,
            grid=(B, num_sq, gn),
            in_specs=[
                pl.BlockSpec((1, S, H), lambda b, sq, g: (b, 0, 0)),      # x (per-batch resident)
                pl.BlockSpec((1, 1, S), lambda b, sq, g: (b, 0, 0)),      # additive mask bias
                pl.BlockSpec((1, H, qw), lambda b, sq, g: (g, 0, 0)),     # packed Wq (scaled)
                pl.BlockSpec((1, 1, qw), lambda b, sq, g: (g, 0, 0)),     # packed bq
                pl.BlockSpec((1, H, 2 * P), lambda b, sq, g: (g, 0, 0)),  # packed [Wk|Wv]
                pl.BlockSpec((1, 1, 2 * P), lambda b, sq, g: (g, 0, 0)),  # packed [bk|bv]
                pl.BlockSpec((1, gs * P, H), lambda b, sq, g: (g, 0, 0)), # packed Wo.T slab
                pl.BlockSpec((1, H), lambda b, sq, g: (0, 0)),            # bo
            ],
            out_specs=pl.BlockSpec((1, tq, H), lambda b, sq, g: (b, sq, 0)),
            scratch_shapes=[pltpu.VMEM((tq, H), jnp.float32)],            # o-proj accumulator
        ),
        compiler_params=pltpu.CompilerParams(
            dimension_semantics=("parallel", "parallel", "arbitrary"),
            vmem_limit_bytes=_vmem_limit_bytes()),
    )(x_bf, bias, packed["wq"], packed["bq"], packed["wkv"], packed["bkv"],
      packed["wo"], packed["bo"])


# ---------------------------------------------------------------------------
# Pure-JAX reference (mirrors the PyTorch forward exactly) for validation.
# ---------------------------------------------------------------------------
def gqa_reference(x, params, *, num_heads, group_size, attention_mask=None):
    Wq, bq, Wk, bk, Wv, bv, Wo, bo = params
    B, S, H = x.shape
    hd = H // num_heads
    gn = num_heads // group_size
    q = x @ Wq.T + bq
    k = x @ Wk.T + bk
    v = x @ Wv.T + bv
    q = q.reshape(B, S, num_heads, hd).transpose(0, 2, 1, 3)
    k = jnp.repeat(k.reshape(B, S, gn, hd).transpose(0, 2, 1, 3), group_size, axis=1)
    v = jnp.repeat(v.reshape(B, S, gn, hd).transpose(0, 2, 1, 3), group_size, axis=1)
    scores = (q @ jnp.swapaxes(k, -1, -2)) / math.sqrt(hd)
    if attention_mask is not None:
        scores = jnp.where(attention_mask[:, None, None, :] == 0, -jnp.inf, scores)
    p = jax.nn.softmax(scores, axis=-1)
    ctx = (p @ v).transpose(0, 2, 1, 3).reshape(B, S, H)
    return ctx @ Wo.T + bo


if __name__ == "__main__":
    # Small shapes consistent with the module.
    B, S, H = 2, 8, 32
    num_heads, group_size = 4, 2
    group_num = num_heads // group_size
    head_dim = H // num_heads

    key = jax.random.PRNGKey(0)
    ks = jax.random.split(key, 9)
    sc = 0.05
    Wq = sc * jax.random.normal(ks[0], (H, H), jnp.float32)
    bq = sc * jax.random.normal(ks[1], (H,), jnp.float32)
    Wk = sc * jax.random.normal(ks[2], (group_num * head_dim, H), jnp.float32)
    bk = sc * jax.random.normal(ks[3], (group_num * head_dim,), jnp.float32)
    Wv = sc * jax.random.normal(ks[4], (group_num * head_dim, H), jnp.float32)
    bv = sc * jax.random.normal(ks[5], (group_num * head_dim,), jnp.float32)
    Wo = sc * jax.random.normal(ks[6], (H, H), jnp.float32)
    bo = sc * jax.random.normal(ks[7], (H,), jnp.float32)
    params = (Wq, bq, Wk, bk, Wv, bv, Wo, bo)

    x = jax.random.normal(ks[8], (B, S, H), jnp.float32)

    # Pack weights once (outside the per-call path).
    packed = pack_gqa_params(params, num_heads=num_heads, group_size=group_size)

    # bf16 MXU operands -> compare against the f32 reference with bf16-level tolerance.
    tol = dict(atol=1e-2, rtol=1e-2)

    # no mask
    out = grouped_query_attention(x, packed, attention_mask=None)
    out = jax.block_until_ready(out)
    ref = gqa_reference(x, params, num_heads=num_heads, group_size=group_size)
    assert out.shape == (B, S, H)
    assert jnp.allclose(out, ref, **tol), "mismatch vs reference (no mask)"

    # with a padding mask (last two key positions of batch 1 masked out)
    attn_mask = jnp.ones((B, S), dtype=jnp.float32)
    attn_mask = attn_mask.at[1, -2:].set(0.0)
    out_m = grouped_query_attention(x, packed, attention_mask=attn_mask)
    out_m = jax.block_until_ready(out_m)
    ref_m = gqa_reference(x, params, num_heads=num_heads, group_size=group_size,
                          attention_mask=attn_mask)
    assert jnp.allclose(out_m, ref_m, **tol), "mismatch vs reference (masked)"

    print("KERNEL_OK")
</pallas_src>

<mosaic_0001>
module attributes {stable_mosaic.version = 11 : i64} {
  func.func @_gqa_kernel(%arg0: i32, %arg1: i32, %arg2: i32, %arg3: memref<1x8x32xbf16, #tpu.memory_space<vmem>>, %arg4: memref<1x1x8xf32, #tpu.memory_space<vmem>>, %arg5: memref<1x32x256xbf16, #tpu.memory_space<vmem>>, %arg6: memref<1x1x256xf32, #tpu.memory_space<vmem>>, %arg7: memref<1x32x256xbf16, #tpu.memory_space<vmem>>, %arg8: memref<1x1x256xf32, #tpu.memory_space<vmem>>, %arg9: memref<1x256x32xbf16, #tpu.memory_space<vmem>>, %arg10: memref<1x32xf32, #tpu.memory_space<vmem>>, %arg11: memref<1x8x32xf32, #tpu.memory_space<vmem>>, %arg12: memref<8x32xf32, #tpu.memory_space<vmem>>) attributes {dimension_semantics = [#tpu.dimension_semantics<parallel>, #tpu.dimension_semantics<parallel>, #tpu.dimension_semantics<arbitrary>], iteration_bounds = array<i64: 2, 1, 2>, scalar_prefetch = 0 : i64, scratch_operands = 1 : i64, tpu.core_type = #tpu.core_type<tc>, window_params = [{transform_indices = @transform_0, window_bounds = array<i64: 1, 8, 32>}, {transform_indices = @transform_1, window_bounds = array<i64: 1, 1, 8>}, {transform_indices = @transform_2, window_bounds = array<i64: 1, 32, 256>}, {transform_indices = @transform_3, window_bounds = array<i64: 1, 1, 256>}, {transform_indices = @transform_4, window_bounds = array<i64: 1, 32, 256>}, {transform_indices = @transform_5, window_bounds = array<i64: 1, 1, 256>}, {transform_indices = @transform_6, window_bounds = array<i64: 1, 256, 32>}, {pipeline_mode = #tpu.pipeline_mode<synchronous>, transform_indices = @transform_7, window_bounds = array<i64: 1, 32>}, {transform_indices = @transform_8, window_bounds = array<i64: 1, 8, 32>}]} {
    %c0_i32 = arith.constant 0 : i32
    %0 = arith.cmpi eq, %arg2, %c0_i32 : i32
    %1 = arith.extui %0 : i1 to i32
    %c0_i32_0 = arith.constant 0 : i32
    %2 = arith.cmpi ne, %1, %c0_i32_0 : i32
    scf.if %2 {
      %cst_51 = arith.constant 0.000000e+00 : f32
      %102 = vector.broadcast %cst_51 : f32 to vector<8x32xf32>
      %c0_52 = arith.constant 0 : index
      %c0_53 = arith.constant 0 : index
      %103 = vector.load %arg12[%c0_52, %c0_53] : memref<8x32xf32, #tpu.memory_space<vmem>>, vector<8x32xf32>
      tpu.vector_store %arg12[%c0_52, %c0_53], %102 {strides = array<i32>} : memref<8x32xf32, #tpu.memory_space<vmem>>, vector<8x32xf32>,
    } else {
    }
    %c8_i32 = arith.constant 8 : i32
    %3 = arith.muli %arg1, %c8_i32 : i32
    %4 = tpu.assume_multiple %3, 8 : i32
    %c0 = arith.constant 0 : index
    %5 = arith.index_cast %4 : i32 to index
    %c0_1 = arith.constant 0 : index
    %6 = vector.load %arg3[%c0, %5, %c0_1] : memref<1x8x32xbf16, #tpu.memory_space<vmem>>, vector<1x8x32xbf16>
    %7 = vector.shape_cast %6 : vector<1x8x32xbf16> to vector<8x32xbf16>
    %c0_2 = arith.constant 0 : index
    %c0_3 = arith.constant 0 : index
    %c0_4 = arith.constant 0 : index
    %8 = vector.load %arg5[%c0_2, %c0_3, %c0_4] : memref<1x32x256xbf16, #tpu.memory_space<vmem>>, vector<1x32x256xbf16>
    %9 = vector.shape_cast %8 : vector<1x32x256xbf16> to vector<32x256xbf16>
    %cst = arith.constant dense<0.000000e+00> : vector<8x256xf32>
    %10 = tpu.matmul %7, %9, %cst {dimension_numbers = #tpu.dot_dimension_numbers<[1], [0], [0], [1], [0, 0, 1, 1], [], []>} : vector<8x32xbf16>, vector<32x256xbf16>, vector<8x256xf32> -> vector<8x256xf32>
    %c0_5 = arith.constant 0 : index
    %c0_6 = arith.constant 0 : index
    %c0_7 = arith.constant 0 : index
    %11 = vector.load %arg6[%c0_5, %c0_6, %c0_7] : memref<1x1x256xf32, #tpu.memory_space<vmem>>, vector<1x1x256xf32>
    %12 = vector.shape_cast %11 : vector<1x1x256xf32> to vector<1x256xf32>
    %13 = vector.broadcast %12 : vector<1x256xf32> to vector<8x256xf32>
    %14 = arith.addf %10, %13 : vector<8x256xf32>
    %15 = arith.truncf %14 : vector<8x256xf32> to vector<8x256xbf16>
    %cst_8 = arith.constant -1.000000e+30 : f32
    %16 = vector.broadcast %cst_8 : f32 to vector<8x1xf32>
    %cst_9 = arith.constant 0.000000e+00 : f32
    %17 = vector.broadcast %cst_9 : f32 to vector<8x1xf32>
    %cst_10 = arith.constant 0.000000e+00 : f32
    %18 = vector.broadcast %cst_10 : f32 to vector<8x128xf32>
    %cst_11 = arith.constant -1.000000e+30 : f32
    %19 = vector.broadcast %cst_11 : f32 to vector<8x1xf32>
    %cst_12 = arith.constant 0.000000e+00 : f32
    %20 = vector.broadcast %cst_12 : f32 to vector<8x1xf32>
    %cst_13 = arith.constant 0.000000e+00 : f32
    %21 = vector.broadcast %cst_13 : f32 to vector<8x128xf32>
    %c0_14 = arith.constant 0 : index
    %c0_15 = arith.constant 0 : index
    %c0_16 = arith.constant 0 : index
    %22 = vector.load %arg3[%c0_14, %c0_15, %c0_16] : memref<1x8x32xbf16, #tpu.memory_space<vmem>>, vector<1x8x32xbf16>
    %23 = vector.shape_cast %22 : vector<1x8x32xbf16> to vector<8x32xbf16>
    %c0_17 = arith.constant 0 : index
    %c0_18 = arith.constant 0 : index
    %c0_19 = arith.constant 0 : index
    %24 = vector.load %arg7[%c0_17, %c0_18, %c0_19] : memref<1x32x256xbf16, #tpu.memory_space<vmem>>, vector<1x32x256xbf16>
    %25 = vector.shape_cast %24 : vector<1x32x256xbf16> to vector<32x256xbf16>
    %cst_20 = arith.constant dense<0.000000e+00> : vector<8x256xf32>
    %26 = tpu.matmul %23, %25, %cst_20 {dimension_numbers = #tpu.dot_dimension_numbers<[1], [0], [0], [1], [0, 0, 1, 1], [], []>} : vector<8x32xbf16>, vector<32x256xbf16>, vector<8x256xf32> -> vector<8x256xf32>
    %c0_21 = arith.constant 0 : index
    %c0_22 = arith.constant 0 : index
    %c0_23 = arith.constant 0 : index
    %27 = vector.load %arg8[%c0_21, %c0_22, %c0_23] : memref<1x1x256xf32, #tpu.memory_space<vmem>>, vector<1x1x256xf32>
    %28 = vector.shape_cast %27 : vector<1x1x256xf32> to vector<1x256xf32>
    %29 = vector.broadcast %28 : vector<1x256xf32> to vector<8x256xf32>
    %30 = arith.addf %26, %29 : vector<8x256xf32>
    %31 = vector.extract_strided_slice %30 {offsets = [0, 0], sizes = [8, 128], strides = [1, 1]} : vector<8x256xf32> to vector<8x128xf32>
    %32 = arith.truncf %31 : vector<8x128xf32> to vector<8x128xbf16>
    %33 = vector.extract_strided_slice %30 {offsets = [0, 128], sizes = [8, 128], strides = [1, 1]} : vector<8x256xf32> to vector<8x128xf32>
    %34 = arith.truncf %33 : vector<8x128xf32> to vector<8x128xbf16>
    %c0_24 = arith.constant 0 : index
    %c0_25 = arith.constant 0 : index
    %c0_26 = arith.constant 0 : index
    %35 = vector.load %arg4[%c0_24, %c0_25, %c0_26] : memref<1x1x8xf32, #tpu.memory_space<vmem>>, vector<1x1x8xf32>
    %36 = vector.shape_cast %35 : vector<1x1x8xf32> to vector<1x8xf32>
    %37 = vector.extract_strided_slice %15 {offsets = [0, 0], sizes = [8, 128], strides = [1, 1]} : vector<8x256xbf16> to vector<8x128xbf16>
    %cst_27 = arith.constant dense<0.000000e+00> : vector<8x8xf32>
    %38 = tpu.matmul %37, %32, %cst_27 {dimension_numbers = #tpu.dot_dimension_numbers<[1], [1], [0], [0], [0, 0, 1, 0], [], []>} : vector<8x128xbf16>, vector<8x128xbf16>, vector<8x8xf32> -> vector<8x8xf32>
    %39 = vector.broadcast %36 : vector<1x8xf32> to vector<8x8xf32>
    %40 = arith.addf %38, %39 : vector<8x8xf32>
    %cst_28 = arith.constant dense<0xFF800000> : vector<8xf32>
    %41 = vector.multi_reduction <maximumf>, %40, %cst_28 [1] : vector<8x8xf32> to vector<8xf32>
    %42 = vector.shape_cast %41 : vector<8xf32> to vector<8x1xf32>
    %43 = arith.maximumf %16, %42 : vector<8x1xf32>
    %44 = arith.subf %16, %43 : vector<8x1xf32>
    %45 = math.exp %44 : vector<8x1xf32>
    %46 = vector.broadcast %43 : vector<8x1xf32> to vector<8x8xf32>
    %47 = arith.subf %40, %46 : vector<8x8xf32>
    %48 = math.exp %47 : vector<8x8xf32>
    %49 = arith.mulf %45, %17 : vector<8x1xf32>
    %cst_29 = arith.constant dense<0.000000e+00> : vector<8xf32>
    %50 = vector.multi_reduction <add>, %48, %cst_29 [1] : vector<8x8xf32> to vector<8xf32>
    %51 = vector.shape_cast %50 : vector<8xf32> to vector<8x1xf32>
    %52 = arith.addf %49, %51 : vector<8x1xf32>
    %53 = vector.broadcast %45 : vector<8x1xf32> to vector<8x128xf32>
    %54 = arith.mulf %53, %18 : vector<8x128xf32>
    %55 = arith.truncf %48 : vector<8x8xf32> to vector<8x8xbf16>
    %cst_30 = arith.constant dense<0.000000e+00> : vector<8x128xf32>
    %56 = tpu.matmul %55, %34, %cst_30 {dimension_numbers = #tpu.dot_dimension_numbers<[1], [0], [0], [1], [0, 0, 1, 1], [], []>} : vector<8x8xbf16>, vector<8x128xbf16>, vector<8x128xf32> -> vector<8x128xf32>
    %57 = arith.addf %54, %56 : vector<8x128xf32>
    %58 = vector.extract_strided_slice %15 {offsets = [0, 128], sizes = [8, 128], strides = [1, 1]} : vector<8x256xbf16> to vector<8x128xbf16>
    %cst_31 = arith.constant dense<0.000000e+00> : vector<8x8xf32>
    %59 = tpu.matmul %58, %32, %cst_31 {dimension_numbers = #tpu.dot_dimension_numbers<[1], [1], [0], [0], [0, 0, 1, 0], [], []>} : vector<8x128xbf16>, vector<8x128xbf16>, vector<8x8xf32> -> vector<8x8xf32>
    %60 = vector.broadcast %36 : vector<1x8xf32> to vector<8x8xf32>
    %61 = arith.addf %59, %60 : vector<8x8xf32>
    %cst_32 = arith.constant dense<0xFF800000> : vector<8xf32>
    %62 = vector.multi_reduction <maximumf>, %61, %cst_32 [1] : vector<8x8xf32> to vector<8xf32>
    %63 = vector.shape_cast %62 : vector<8xf32> to vector<8x1xf32>
    %64 = arith.maximumf %19, %63 : vector<8x1xf32>
    %65 = arith.subf %19, %64 : vector<8x1xf32>
    %66 = math.exp %65 : vector<8x1xf32>
    %67 = vector.broadcast %64 : vector<8x1xf32> to vector<8x8xf32>
    %68 = arith.subf %61, %67 : vector<8x8xf32>
    %69 = math.exp %68 : vector<8x8xf32>
    %70 = arith.mulf %66, %20 : vector<8x1xf32>
    %cst_33 = arith.constant dense<0.000000e+00> : vector<8xf32>
    %71 = vector.multi_reduction <add>, %69, %cst_33 [1] : vector<8x8xf32> to vector<8xf32>
    %72 = vector.shape_cast %71 : vector<8xf32> to vector<8x1xf32>
    %73 = arith.addf %70, %72 : vector<8x1xf32>
    %74 = vector.broadcast %66 : vector<8x1xf32> to vector<8x128xf32>
    %75 = arith.mulf %74, %21 : vector<8x128xf32>
    %76 = arith.truncf %69 : vector<8x8xf32> to vector<8x8xbf16>
    %cst_34 = arith.constant dense<0.000000e+00> : vector<8x128xf32>
    %77 = tpu.matmul %76, %34, %cst_34 {dimension_numbers = #tpu.dot_dimension_numbers<[1], [0], [0], [1], [0, 0, 1, 1], [], []>} : vector<8x8xbf16>, vector<8x128xbf16>, vector<8x128xf32> -> vector<8x128xf32>
    %78 = arith.addf %75, %77 : vector<8x128xf32>
    %79 = tpu.reciprocal %52 {approx = true} : vector<8x1xf32> -> vector<8x1xf32>
    %80 = vector.broadcast %79 : vector<8x1xf32> to vector<8x128xf32>
    %81 = arith.mulf %57, %80 : vector<8x128xf32>
    %c0_35 = arith.constant 0 : index
    %c0_36 = arith.constant 0 : index
    %82 = vector.load %arg12[%c0_35, %c0_36] : memref<8x32xf32, #tpu.memory_space<vmem>>, vector<8x32xf32>
    %83 = arith.truncf %81 : vector<8x128xf32> to vector<8x128xbf16>
    %c0_37 = arith.constant 0 : index
    %c0_38 = arith.constant 0 : index
    %c0_39 = arith.constant 0 : index
    %84 = vector.load %arg9[%c0_37, %c0_38, %c0_39] : memref<1x256x32xbf16, #tpu.memory_space<vmem>>, vector<1x128x32xbf16>
    %85 = vector.shape_cast %84 : vector<1x128x32xbf16> to vector<128x32xbf16>
    %cst_40 = arith.constant dense<0.000000e+00> : vector<8x32xf32>
    %86 = tpu.matmul %83, %85, %cst_40 {dimension_numbers = #tpu.dot_dimension_numbers<[1], [0], [0], [1], [0, 0, 1, 1], [], []>} : vector<8x128xbf16>, vector<128x32xbf16>, vector<8x32xf32> -> vector<8x32xf32>
    %87 = arith.addf %82, %86 : vector<8x32xf32>
    %c0_41 = arith.constant 0 : index
    %c0_42 = arith.constant 0 : index
    %88 = vector.load %arg12[%c0_41, %c0_42] : memref<8x32xf32, #tpu.memory_space<vmem>>, vector<8x32xf32>
    tpu.vector_store %arg12[%c0_41, %c0_42], %87 {strides = array<i32>} : memref<8x32xf32, #tpu.memory_space<vmem>>, vector<8x32xf32>,
    %89 = tpu.reciprocal %73 {approx = true} : vector<8x1xf32> -> vector<8x1xf32>
    %90 = vector.broadcast %89 : vector<8x1xf32> to vector<8x128xf32>
    %91 = arith.mulf %78, %90 : vector<8x128xf32>
    %c0_43 = arith.constant 0 : index
    %c0_44 = arith.constant 0 : index
    %92 = vector.load %arg12[%c0_43, %c0_44] : memref<8x32xf32, #tpu.memory_space<vmem>>, vector<8x32xf32>
    %93 = arith.truncf %91 : vector<8x128xf32> to vector<8x128xbf16>
    %c0_45 = arith.constant 0 : index
    %c128 = arith.constant 128 : index
    %c0_46 = arith.constant 0 : index
    %94 = vector.load %arg9[%c0_45, %c128, %c0_46] : memref<1x256x32xbf16, #tpu.memory_space<vmem>>, vector<1x128x32xbf16>
    %95 = vector.shape_cast %94 : vector<1x128x32xbf16> to vector<128x32xbf16>
    %cst_47 = arith.constant dense<0.000000e+00> : vector<8x32xf32>
    %96 = tpu.matmul %93, %95, %cst_47 {dimension_numbers = #tpu.dot_dimension_numbers<[1], [0], [0], [1], [0, 0, 1, 1], [], []>} : vector<8x128xbf16>, vector<128x32xbf16>, vector<8x32xf32> -> vector<8x32xf32>
    %97 = arith.addf %92, %96 : vector<8x32xf32>
    %c0_48 = arith.constant 0 : index
    %c0_49 = arith.constant 0 : index
    %98 = vector.load %arg12[%c0_48, %c0_49] : memref<8x32xf32, #tpu.memory_space<vmem>>, vector<8x32xf32>
    tpu.vector_store %arg12[%c0_48, %c0_49], %97 {strides = array<i32>} : memref<8x32xf32, #tpu.memory_space<vmem>>, vector<8x32xf32>,
    %c1_i32 = arith.constant 1 : i32
    %99 = arith.cmpi eq, %arg2, %c1_i32 : i32
    %100 = arith.extui %99 : i1 to i32
    %c0_i32_50 = arith.constant 0 : i32
    %101 = arith.cmpi ne, %100, %c0_i32_50 : i32
    scf.if %101 {
      %c0_51 = arith.constant 0 : index
      %c0_52 = arith.constant 0 : index
      %102 = vector.load %arg12[%c0_51, %c0_52] : memref<8x32xf32, #tpu.memory_space<vmem>>, vector<8x32xf32>
      %c0_53 = arith.constant 0 : index
      %c0_54 = arith.constant 0 : index
      %103 = vector.load %arg10[%c0_53, %c0_54] : memref<1x32xf32, #tpu.memory_space<vmem>>, vector<1x32xf32>
      %104 = vector.broadcast %103 : vector<1x32xf32> to vector<8x32xf32>
      %105 = arith.addf %102, %104 : vector<8x32xf32>
      %c0_55 = arith.constant 0 : index
      %c0_56 = arith.constant 0 : index
      %c0_57 = arith.constant 0 : index
      %106 = vector.load %arg11[%c0_55, %c0_56, %c0_57] : memref<1x8x32xf32, #tpu.memory_space<vmem>>, vector<1x8x32xf32>
      %107 = vector.shape_cast %106 : vector<1x8x32xf32> to vector<8x32xf32>
      %108 = vector.shape_cast %105 : vector<8x32xf32> to vector<1x8x32xf32>
      tpu.vector_store %arg11[%c0_55, %c0_56, %c0_57], %108 {strides = array<i32>} : memref<1x8x32xf32, #tpu.memory_space<vmem>>, vector<1x8x32xf32>,
    } else {
    }
    return
  }
  func.func @transform_0(%arg0: i32, %arg1: i32, %arg2: i32) -> (i32, i32, i32) {
    %c0_i32 = arith.constant 0 : i32
    %c0_i32_0 = arith.constant 0 : i32
    %c0_i32_1 = arith.constant 0 : i32
    return %arg0, %c0_i32, %c0_i32_0 : i32, i32, i32
  }
  func.func @transform_1(%arg0: i32, %arg1: i32, %arg2: i32) -> (i32, i32, i32) {
    %c0_i32 = arith.constant 0 : i32
    %c0_i32_0 = arith.constant 0 : i32
    %c0_i32_1 = arith.constant 0 : i32
    return %arg0, %c0_i32, %c0_i32_0 : i32, i32, i32
  }
  func.func @transform_2(%arg0: i32, %arg1: i32, %arg2: i32) -> (i32, i32, i32) {
    %c0_i32 = arith.constant 0 : i32
    %c0_i32_0 = arith.constant 0 : i32
    %c0_i32_1 = arith.constant 0 : i32
    return %arg2, %c0_i32, %c0_i32_0 : i32, i32, i32
  }
  func.func @transform_3(%arg0: i32, %arg1: i32, %arg2: i32) -> (i32, i32, i32) {
    %c0_i32 = arith.constant 0 : i32
    %c0_i32_0 = arith.constant 0 : i32
    %c0_i32_1 = arith.constant 0 : i32
    return %arg2, %c0_i32, %c0_i32_0 : i32, i32, i32
  }
  func.func @transform_4(%arg0: i32, %arg1: i32, %arg2: i32) -> (i32, i32, i32) {
    %c0_i32 = arith.constant 0 : i32
    %c0_i32_0 = arith.constant 0 : i32
    %c0_i32_1 = arith.constant 0 : i32
    return %arg2, %c0_i32, %c0_i32_0 : i32, i32, i32
  }
  func.func @transform_5(%arg0: i32, %arg1: i32, %arg2: i32) -> (i32, i32, i32) {
    %c0_i32 = arith.constant 0 : i32
    %c0_i32_0 = arith.constant 0 : i32
    %c0_i32_1 = arith.constant 0 : i32
    return %arg2, %c0_i32, %c0_i32_0 : i32, i32, i32
  }
  func.func @transform_6(%arg0: i32, %arg1: i32, %arg2: i32) -> (i32, i32, i32) {
    %c0_i32 = arith.constant 0 : i32
    %c0_i32_0 = arith.constant 0 : i32
    %c0_i32_1 = arith.constant 0 : i32
    return %arg2, %c0_i32, %c0_i32_0 : i32, i32, i32
  }
  func.func @transform_7(%arg0: i32, %arg1: i32, %arg2: i32) -> (i32, i32) {
    %c0_i32 = arith.constant 0 : i32
    %c0_i32_0 = arith.constant 0 : i32
    %c0_i32_1 = arith.constant 0 : i32
    return %c0_i32, %c0_i32_0 : i32, i32
  }
  func.func @transform_8(%arg0: i32, %arg1: i32, %arg2: i32) -> (i32, i32, i32) {
    %c0_i32 = arith.constant 0 : i32
    %c0_i32_0 = arith.constant 0 : i32
    return %arg0, %arg1, %c0_i32 : i32, i32, i32
  }
}

</mosaic_0001>

<llo_original>
// kernel: tpu_custom_call.1
$region0: #{tpu_custom_call.1}
  #allocation0 [shape = 'u32[]', space=smem, size = 0x4, offset = 0x4, fixed_abs, tag = 'smem constant byte address 0x4 - core index']
  #allocation1 [shape = 'u32[144,128]{1,0:T(1,128)}', space=vmem, size = 0x12000, scoped, tag = 'internal scratch']
  #allocation2 [shape = 'f32[8,32]{1,0:T(8,128)}', space=vmem, size = 0x1000, scoped, tag = 'scratch operand']
  %s0 = inlined_call_operand.vmem [shape: bf16[2,8,32], index: 0, kind: input, shape index: {}]
  %s1 = inlined_call_operand.vmem [shape: f32[2,1,8], index: 1, kind: input, shape index: {}]
  %s2 = inlined_call_operand.vmem [shape: bf16[2,32,256], index: 2, kind: input, shape index: {}]
  %s3 = inlined_call_operand.vmem [shape: f32[2,1,256], index: 3, kind: input, shape index: {}]
  %s4 = inlined_call_operand.vmem [shape: bf16[2,32,256], index: 4, kind: input, shape index: {}]
  %s5 = inlined_call_operand.vmem [shape: f32[2,1,256], index: 5, kind: input, shape index: {}]
  %s6 = inlined_call_operand.vmem [shape: bf16[2,256,32], index: 6, kind: input, shape index: {}]
  %s7 = inlined_call_operand.vmem [shape: f32[1,32], index: 7, kind: input, shape index: {}]
  %s8 = inlined_call_operand.hbm [shape: f32[2,8,32], index: 8, kind: output, shape index: {}]
  %s9 = sld [smem:[#allocation0]]
  $region73: #{tpu_custom_call.1} parent=0
    _
  %s11 = ssub.s32 1, %s9
  %s12 = scalar_select 0, %s11, %s9
  $region1: #{tpu_custom_call.1} parent=0
    #allocation3 [shape = 'u8[8192]{0}', space=vmem, size = 0x2000, scoped, tag = 'output window, operand 0']
    #allocation4 [shape = 's32[2]{0}', space=sflag, size = 0x8, scoped, tag = 'scoped memory for tpu_custom_call.1']
    %13 = vsyncpa [#allocation4], 0
    %s14 = scalar_lea.sflag [#allocation4], 1
    %15 = vsyncpa %s14, 0
    loop: start=0, step=1, limit=6
    $region2: #{tpu_custom_call.1} parent=1 // loop_pre_header
      _
    $region3: #{tpu_custom_call.1} parent=1 // loop_header
      %s17 = sphi 0, %s21
      %p18 = scmp.ge.s32.totalorder %s17, 6
      %s24 = sphi 0, %s43
      %s25 = sphi 0, %s39
      %s26 = sphi 0, %s35
      %s27 = sphi 0, %s24
      %s28 = sphi 0, %s25
      %s29 = sphi 0, %s26
      %s30 = sphi 0, %s27
      %s31 = sphi 0, %s28
      %s32 = sphi 0, %s29
      %s46 = sphi 0, %s48
      %s49 = sphi 0, %s46
      %s50 = sphi 0, %s49
      %s66 = sphi 0, %s50
      %s72 = sphi 0, %s74
      %s75 = sphi 0, %s72
      %s76 = sphi 0, %s75
      %s92 = sphi 0, %s76
      %s98 = sphi 0, %s100
      %s101 = sphi 0, %s98
      %s102 = sphi 0, %s101
      %s118 = sphi 0, %s102
      %s124 = sphi 0, %s126
      %s127 = sphi 0, %s124
      %s128 = sphi 0, %s127
      %s144 = sphi 0, %s128
      %s150 = sphi 0, %s152
      %s153 = sphi 0, %s150
      %s154 = sphi 0, %s153
      %s170 = sphi 0, %s154
      %s176 = sphi 0, %s178
      %s179 = sphi 0, %s176
      %s180 = sphi 0, %s179
      %s196 = sphi 0, %s180
      %s202 = sphi 0, %s204
      %s205 = sphi 0, %s202
      %s206 = sphi 0, %s205
      %s222 = sphi 0, %s206
      %s226 = sphi 0, %s226
      %s228 = sphi 0, %s226
      %s229 = sphi 0, %s228
      %s243 = sphi 0, %s229
      %s251 = sphi 0, %s253
      %s254 = sphi 0, %s251
      %s255 = sphi 0, %s254
      %s271 = sphi 0, %s255
    $region4: #{tpu_custom_call.1} parent=1 // loop_header_branch
      %20 = sbr.rel (%p18) target = $region8
    $region5: #{tpu_custom_call.1} parent=1 // loop_body
      %s22 = ssub.s32 %s17, 1
      %s23 = ssub.s32 %s17, 2
      %s33 = sadd.s32 1, %s26
      %p34 = scmp.ge.s32.totalorder %s33, 2
      %s35 = scalar_select %p34, 0, %s33
      %s36 = sadd.s32 1, %s25
      %s37 = scalar_select %p34, %s36, %s25
      %p38 = scmp.ge.s32.totalorder %s37, 1
      %s39 = scalar_select %p38, 0, %s37
      %s40 = sadd.s32 1, %s24
      %s41 = scalar_select %p38, %s40, %s24
      %p42 = scmp.ge.s32.totalorder %s41, 2
      %s43 = scalar_select %p42, 0, %s41
      %s44 = ssub.s32 %s24, %s43
      %p45 = scmp.eq.s32.totalorder %s44, 0
      %s47 = sadd.s32 %s46, 1
      %s48 = scalar_select %p45, %s46, %s47
      %p51 = pneg %p45
      %p52 = scmp.eq.s32.totalorder %s17, 3
      %p53 = por %p51, %p52
      %p54 = scmp.ne.s32.totalorder %s46, %s49
      %p55 = scmp.eq.s32.totalorder %s17, 0
      %p56 = por %p54, %p55
      %p57 = scmp.ne.s32.totalorder %s46, %s49
      %p58 = scmp.eq.s32.totalorder %s22, 3
      %p59 = por %p57, %p58
      %p60 = scmp.ne.s32.totalorder %s49, %s50
      %p61 = scmp.eq.s32.totalorder %s22, 0
      %p62 = por %p60, %p61
      %p63 = scmp.ne.s32.totalorder %s49, %s50
      %p64 = scmp.eq.s32.totalorder %s23, 3
      %p65 = por %p63, %p64
      %p67 = scmp.ne.s32.totalorder %s50, %s66
      %p68 = scmp.eq.s32.totalorder %s23, 0
      %p69 = por %p67, %p68
      %s70 = ssub.s32 %s24, %s43
      %p71 = scmp.eq.s32.totalorder %s70, 0
      %s73 = sadd.s32 %s72, 1
      %s74 = scalar_select %p71, %s72, %s73
      %p77 = pneg %p71
      %p78 = scmp.eq.s32.totalorder %s17, 3
      %p79 = por %p77, %p78
      %p80 = scmp.ne.s32.totalorder %s72, %s75
      %p81 = scmp.eq.s32.totalorder %s17, 0
      %p82 = por %p80, %p81
      %p83 = scmp.ne.s32.totalorder %s72, %s75
      %p84 = scmp.eq.s32.totalorder %s22, 3
      %p85 = por %p83, %p84
      %p86 = scmp.ne.s32.totalorder %s75, %s76
      %p87 = scmp.eq.s32.totalorder %s22, 0
      %p88 = por %p86, %p87
      %p89 = scmp.ne.s32.totalorder %s75, %s76
      %p90 = scmp.eq.s32.totalorder %s23, 3
      %p91 = por %p89, %p90
      %p93 = scmp.ne.s32.totalorder %s76, %s92
      %p94 = scmp.eq.s32.totalorder %s23, 0
      %p95 = por %p93, %p94
      %s96 = ssub.s32 %s26, %s35
      %p97 = scmp.eq.s32.totalorder %s96, 0
      %s99 = sadd.s32 %s98, 1
      %s100 = scalar_select %p97, %s98, %s99
      %p103 = pneg %p97
      %p104 = scmp.eq.s32.totalorder %s17, 3
      %p105 = por %p103, %p104
      %p106 = scmp.ne.s32.totalorder %s98, %s101
      %p107 = scmp.eq.s32.totalorder %s17, 0
      %p108 = por %p106, %p107
      %p109 = scmp.ne.s32.totalorder %s98, %s101
      %p110 = scmp.eq.s32.totalorder %s22, 3
      %p111 = por %p109, %p110
      %p112 = scmp.ne.s32.totalorder %s101, %s102
      %p113 = scmp.eq.s32.totalorder %s22, 0
      %p114 = por %p112, %p113
      %p115 = scmp.ne.s32.totalorder %s101, %s102
      %p116 = scmp.eq.s32.totalorder %s23, 3
      %p117 = por %p115, %p116
      %p119 = scmp.ne.s32.totalorder %s102, %s118
      %p120 = scmp.eq.s32.totalorder %s23, 0
      %p121 = por %p119, %p120
      %s122 = ssub.s32 %s26, %s35
      %p123 = scmp.eq.s32.totalorder %s122, 0
      %s125 = sadd.s32 %s124, 1
      %s126 = scalar_select %p123, %s124, %s125
      %p129 = pneg %p123
      %p130 = scmp.eq.s32.totalorder %s17, 3
      %p131 = por %p129, %p130
      %p132 = scmp.ne.s32.totalorder %s124, %s127
      %p133 = scmp.eq.s32.totalorder %s17, 0
      %p134 = por %p132, %p133
      %p135 = scmp.ne.s32.totalorder %s124, %s127
      %p136 = scmp.eq.s32.totalorder %s22, 3
      %p137 = por %p135, %p136
      %p138 = scmp.ne.s32.totalorder %s127, %s128
      %p139 = scmp.eq.s32.totalorder %s22, 0
      %p140 = por %p138, %p139
      %p141 = scmp.ne.s32.totalorder %s127, %s128
      %p142 = scmp.eq.s32.totalorder %s23, 3
      %p143 = por %p141, %p142
      %p145 = scmp.ne.s32.totalorder %s128, %s144
      %p146 = scmp.eq.s32.totalorder %s23, 0
      %p147 = por %p145, %p146
      %s148 = ssub.s32 %s26, %s35
      %p149 = scmp.eq.s32.totalorder %s148, 0
      %s151 = sadd.s32 %s150, 1
      %s152 = scalar_select %p149, %s150, %s151
      %p155 = pneg %p149
      %p156 = scmp.eq.s32.totalorder %s17, 3
      %p157 = por %p155, %p156
      %p158 = scmp.ne.s32.totalorder %s150, %s153
      %p159 = scmp.eq.s32.totalorder %s17, 0
      %p160 = por %p158, %p159
      %p161 = scmp.ne.s32.totalorder %s150, %s153
      %p162 = scmp.eq.s32.totalorder %s22, 3
      %p163 = por %p161, %p162
      %p164 = scmp.ne.s32.totalorder %s153, %s154
      %p165 = scmp.eq.s32.totalorder %s22, 0
      %p166 = por %p164, %p165
      %p167 = scmp.ne.s32.totalorder %s153, %s154
      %p168 = scmp.eq.s32.totalorder %s23, 3
      %p169 = por %p167, %p168
      %p171 = scmp.ne.s32.totalorder %s154, %s170
      %p172 = scmp.eq.s32.totalorder %s23, 0
      %p173 = por %p171, %p172
      %s174 = ssub.s32 %s26, %s35
      %p175 = scmp.eq.s32.totalorder %s174, 0
      %s177 = sadd.s32 %s176, 1
      %s178 = scalar_select %p175, %s176, %s177
      %p181 = pneg %p175
      %p182 = scmp.eq.s32.totalorder %s17, 3
      %p183 = por %p181, %p182
      %p184 = scmp.ne.s32.totalorder %s176, %s179
      %p185 = scmp.eq.s32.totalorder %s17, 0
      %p186 = por %p184, %p185
      %p187 = scmp.ne.s32.totalorder %s176, %s179
      %p188 = scmp.eq.s32.totalorder %s22, 3
      %p189 = por %p187, %p188
      %p190 = scmp.ne.s32.totalorder %s179, %s180
      %p191 = scmp.eq.s32.totalorder %s22, 0
      %p192 = por %p190, %p191
      %p193 = scmp.ne.s32.totalorder %s179, %s180
      %p194 = scmp.eq.s32.totalorder %s23, 3
      %p195 = por %p193, %p194
      %p197 = scmp.ne.s32.totalorder %s180, %s196
      %p198 = scmp.eq.s32.totalorder %s23, 0
      %p199 = por %p197, %p198
      %s200 = ssub.s32 %s26, %s35
      %p201 = scmp.eq.s32.totalorder %s200, 0
      %s203 = sadd.s32 %s202, 1
      %s204 = scalar_select %p201, %s202, %s203
      %p207 = pneg %p201
      %p208 = scmp.eq.s32.totalorder %s17, 3
      %p209 = por %p207, %p208
      %p210 = scmp.ne.s32.totalorder %s202, %s205
      %p211 = scmp.eq.s32.totalorder %s17, 0
      %p212 = por %p210, %p211
      %p213 = scmp.ne.s32.totalorder %s202, %s205
      %p214 = scmp.eq.s32.totalorder %s22, 3
      %p215 = por %p213, %p214
      %p216 = scmp.ne.s32.totalorder %s205, %s206
      %p217 = scmp.eq.s32.totalorder %s22, 0
      %p218 = por %p216, %p217
      %p219 = scmp.ne.s32.totalorder %s205, %s206
      %p220 = scmp.eq.s32.totalorder %s23, 3
      %p221 = por %p219, %p220
      %p223 = scmp.ne.s32.totalorder %s206, %s222
      %p224 = scmp.eq.s32.totalorder %s23, 0
      %p225 = por %p223, %p224
      %s227 = sadd.s32 %s226, 1
      %p230 = scmp.eq.s32.totalorder %s17, 3
      %p231 = scmp.ne.s32.totalorder %s226, %s228
      %p232 = scmp.eq.s32.totalorder %s17, 0
      %p233 = por %p231, %p232
      %p234 = scmp.ne.s32.totalorder %s226, %s228
      %p235 = scmp.eq.s32.totalorder %s22, 3
      %p236 = por %p234, %p235
      %p237 = scmp.ne.s32.totalorder %s228, %s229
      %p238 = scmp.eq.s32.totalorder %s22, 0
      %p239 = por %p237, %p238
      %p240 = scmp.ne.s32.totalorder %s228, %s229
      %p241 = scmp.eq.s32.totalorder %s23, 3
      %p242 = por %p240, %p241
      %p244 = scmp.ne.s32.totalorder %s229, %s243
      %p245 = scmp.eq.s32.totalorder %s23, 0
      %p246 = por %p244, %p245
      %s247 = ssub.s32 %s24, %s43
      %s248 = ssub.s32 %s25, %s39
      %s249 = sor.u32 %s247, %s248
      %p250 = scmp.eq.s32.totalorder %s249, 0
      %s252 = sadd.s32 %s251, 1
      %s253 = scalar_select %p250, %s251, %s252
      %p256 = pneg %p250
      %p257 = scmp.eq.s32.totalorder %s17, 3
      %p258 = por %p256, %p257
      %p259 = scmp.ne.s32.totalorder %s251, %s254
      %p260 = scmp.eq.s32.totalorder %s17, 0
      %p261 = por %p259, %p260
      %p262 = scmp.ne.s32.totalorder %s251, %s254
      %p263 = scmp.eq.s32.totalorder %s22, 3
      %p264 = por %p262, %p263
      %p265 = scmp.ne.s32.totalorder %s254, %s255
      %p266 = scmp.eq.s32.totalorder %s22, 0
      %p267 = por %p265, %p266
      %p268 = scmp.ne.s32.totalorder %s254, %s255
      %p269 = scmp.eq.s32.totalorder %s23, 3
      %p270 = por %p268, %p269
      %p272 = scmp.ne.s32.totalorder %s255, %s271
      %p273 = scmp.eq.s32.totalorder %s23, 0
      %p274 = por %p272, %p273
      %p275 = scmp.le.s32.totalorder 1, %s17
      %p276 = scmp.lt.s32.totalorder %s17, 5
      %p277 = pnand %p275, %p276
      %p278 = pneg %p277
      // Predicated region
      $region9: #{tpu_custom_call.1} parent=5 // pred_check
        _
      $region10: #{tpu_custom_call.1} parent=5 // pred_check_branch
        %280 = sbr.rel (%p277) target = $region12
      $region11: #{tpu_custom_call.1} parent=5 // pred_region
        %s281 = ssub.s32 %s17, 1
        // Predicated region
        $region13: #{tpu_custom_call.1} parent=11 // pred_check
          %p282 = pneg %p239
        $region14: #{tpu_custom_call.1} parent=11 // pred_check_branch
          %284 = sbr.rel (%p282) target = $region16
        $region15: #{tpu_custom_call.1} parent=11 // pred_region
          _
        $region16: #{tpu_custom_call.1} parent=11 // pred_fallthru
          _
      $region12: #{tpu_custom_call.1} parent=5 // pred_fallthru
        _
      %p285 = scmp.lt.s32.totalorder %s17, 4
      // Predicated region
      $region17: #{tpu_custom_call.1} parent=5 // pred_check
        %p286 = pneg %p285
      $region18: #{tpu_custom_call.1} parent=5 // pred_check_branch
        %288 = sbr.rel (%p286) target = $region20
      $region19: #{tpu_custom_call.1} parent=5 // pred_region
        // Predicated region
        $region21: #{tpu_custom_call.1} parent=19 // pred_check
          %p289 = pneg %p56
        $region22: #{tpu_custom_call.1} parent=19 // pred_check_branch
          %291 = sbr.rel (%p289) target = $region24
        $region23: #{tpu_custom_call.1} parent=19 // pred_region
          %p292 = scmp.lt.s32.totalorder %s24, 1
          %s293 = scalar_select %p292, %s24, 1
          %s294 = smul.addr %s293, 4
          %s295 = scalar_lea.vmem %s0, %s294
        $region24: #{tpu_custom_call.1} parent=19 // pred_fallthru
          _
        // Predicated region
        $region25: #{tpu_custom_call.1} parent=19 // pred_check
          %p296 = pneg %p82
        $region26: #{tpu_custom_call.1} parent=19 // pred_check_branch
          %298 = sbr.rel (%p296) target = $region28
        $region27: #{tpu_custom_call.1} parent=19 // pred_region
          %p299 = scmp.lt.s32.totalorder %s24, 1
          %s300 = scalar_select %p299, %s24, 1
          %s301 = scalar_lea.vmem %s1, %s300
        $region28: #{tpu_custom_call.1} parent=19 // pred_fallthru
          _
        // Predicated region
        $region29: #{tpu_custom_call.1} parent=19 // pred_check
          %p302 = pneg %p108
        $region30: #{tpu_custom_call.1} parent=19 // pred_check_branch
          %304 = sbr.rel (%p302) target = $region32
        $region31: #{tpu_custom_call.1} parent=19 // pred_region
          %p305 = scmp.lt.s32.totalorder %s26, 1
          %s306 = scalar_select %p305, %s26, 1
          %s307 = smul.addr %s306, 8
          %s308 = smul.addr %s307, 4
          %s309 = scalar_lea.vmem %s2, %s308
        $region32: #{tpu_custom_call.1} parent=19 // pred_fallthru
          _
        // Predicated region
        $region33: #{tpu_custom_call.1} parent=19 // pred_check
          %p310 = pneg %p134
        $region34: #{tpu_custom_call.1} parent=19 // pred_check_branch
          %312 = sbr.rel (%p310) target = $region36
        $region35: #{tpu_custom_call.1} parent=19 // pred_region
          %p313 = scmp.lt.s32.totalorder %s26, 1
          %s314 = scalar_select %p313, %s26, 1
          %s315 = smul.addr %s314, 2
          %s316 = scalar_lea.vmem %s3, %s315
        $region36: #{tpu_custom_call.1} parent=19 // pred_fallthru
          _
        // Predicated region
        $region37: #{tpu_custom_call.1} parent=19 // pred_check
          %p317 = pneg %p160
        $region38: #{tpu_custom_call.1} parent=19 // pred_check_branch
          %319 = sbr.rel (%p317) target = $region40
        $region39: #{tpu_custom_call.1} parent=19 // pred_region
          %p320 = scmp.lt.s32.totalorder %s26, 1
          %s321 = scalar_select %p320, %s26, 1
          %s322 = smul.addr %s321, 8
          %s323 = smul.addr %s322, 4
          %s324 = scalar_lea.vmem %s4, %s323
        $region40: #{tpu_custom_call.1} parent=19 // pred_fallthru
          _
        // Predicated region
        $region41: #{tpu_custom_call.1} parent=19 // pred_check
          %p325 = pneg %p186
        $region42: #{tpu_custom_call.1} parent=19 // pred_check_branch
          %327 = sbr.rel (%p325) target = $region44
        $region43: #{tpu_custom_call.1} parent=19 // pred_region
          %p328 = scmp.lt.s32.totalorder %s26, 1
          %s329 = scalar_select %p328, %s26, 1
          %s330 = smul.addr %s329, 2
          %s331 = scalar_lea.vmem %s5, %s330
        $region44: #{tpu_custom_call.1} parent=19 // pred_fallthru
          _
        // Predicated region
        $region45: #{tpu_custom_call.1} parent=19 // pred_check
          %p332 = pneg %p212
        $region46: #{tpu_custom_call.1} parent=19 // pred_check_branch
          %334 = sbr.rel (%p332) target = $region48
        $region47: #{tpu_custom_call.1} parent=19 // pred_region
          %p335 = scmp.lt.s32.totalorder %s26, 1
          %s336 = scalar_select %p335, %s26, 1
          %s337 = smul.addr %s336, 32
          %s338 = smul.addr %s337, 4
          %s339 = scalar_lea.vmem %s6, %s338
        $region48: #{tpu_custom_call.1} parent=19 // pred_fallthru
          _
      $region20: #{tpu_custom_call.1} parent=5 // pred_fallthru
        _
      %p340 = scmp.le.s32.totalorder 1, %s17
      %p341 = scmp.lt.s32.totalorder %s17, 5
      %p342 = pnand %p340, %p341
      %p343 = pneg %p342
      // Predicated region
      $region49: #{tpu_custom_call.1} parent=5 // pred_check
        _
      $region50: #{tpu_custom_call.1} parent=5 // pred_check_branch
        %345 = sbr.rel (%p342) target = $region52
      $region51: #{tpu_custom_call.1} parent=5 // pred_region
        %s346 = ssub.s32 %s17, 1
        %p347 = scmp.lt.s32.totalorder %s27, 1
        %s348 = scalar_select %p347, %s27, 1
        %s349 = smul.addr %s348, 4
        %s350 = scalar_lea.vmem %s0, %s349
        %p351 = pneg %p62
        %p352 = pneg %p59
        %p353 = scmp.lt.s32.totalorder %s27, 1
        %s354 = scalar_select %p353, %s27, 1
        %s355 = scalar_lea.vmem %s1, %s354
        %p356 = pneg %p88
        %p357 = pneg %p85
        %p358 = scmp.lt.s32.totalorder %s29, 1
        %s359 = scalar_select %p358, %s29, 1
        %s360 = smul.addr %s359, 8
        %s361 = smul.addr %s360, 4
        %s362 = scalar_lea.vmem %s2, %s361
        %p363 = pneg %p114
        %p364 = pneg %p111
        %p365 = scmp.lt.s32.totalorder %s29, 1
        %s366 = scalar_select %p365, %s29, 1
        %s367 = smul.addr %s366, 2
        %s368 = scalar_lea.vmem %s3, %s367
        %p369 = pneg %p140
        %p370 = pneg %p137
        %p371 = scmp.lt.s32.totalorder %s29, 1
        %s372 = scalar_select %p371, %s29, 1
        %s373 = smul.addr %s372, 8
        %s374 = smul.addr %s373, 4
        %s375 = scalar_lea.vmem %s4, %s374
        %p376 = pneg %p166
        %p377 = pneg %p163
        %p378 = scmp.lt.s32.totalorder %s29, 1
        %s379 = scalar_select %p378, %s29, 1
        %s380 = smul.addr %s379, 2
        %s381 = scalar_lea.vmem %s5, %s380
        %p382 = pneg %p192
        %p383 = pneg %p189
        %p384 = scmp.lt.s32.totalorder %s29, 1
        %s385 = scalar_select %p384, %s29, 1
        %s386 = smul.addr %s385, 32
        %s387 = smul.addr %s386, 4
        %s388 = scalar_lea.vmem %s6, %s387
        %p389 = pneg %p218
        %p390 = pneg %p215
        %p391 = pneg %p239
        %p392 = pneg %p236
        %p393 = pneg %p267
        %p394 = pneg %p264
        %s395 = sand.u32 %s254, 1
        %s396 = scalar_lea.sflag [#allocation4], %s395
        %s397 = sand.u32 %s254, 1
        %s398 = smul.addr %s397, 8
        %s399 = scalar_lea.vmem [#allocation3], %s398
        %p400 = scmp.lt.s32.totalorder %s27, 1
        %s401 = scalar_select %p400, %s27, 1
        %s402 = smul.addr %s401, 4
        %s403 = scalar_lea.vmem %s0, %s402
        %p404 = scmp.lt.s32.totalorder %s27, 1
        %s405 = scalar_select %p404, %s27, 1
        %s406 = scalar_lea.vmem %s1, %s405
        %p407 = scmp.lt.s32.totalorder %s29, 1
        %s408 = scalar_select %p407, %s29, 1
        %s409 = smul.addr %s408, 8
        %s410 = smul.addr %s409, 4
        %s411 = scalar_lea.vmem %s2, %s410
        %p412 = scmp.lt.s32.totalorder %s29, 1
        %s413 = scalar_select %p412, %s29, 1
        %s414 = smul.addr %s413, 2
        %s415 = scalar_lea.vmem %s3, %s414
        %p416 = scmp.lt.s32.totalorder %s29, 1
        %s417 = scalar_select %p416, %s29, 1
        %s418 = smul.addr %s417, 8
        %s419 = smul.addr %s418, 4
        %s420 = scalar_lea.vmem %s4, %s419
        %p421 = scmp.lt.s32.totalorder %s29, 1
        %s422 = scalar_select %p421, %s29, 1
        %s423 = smul.addr %s422, 2
        %s424 = scalar_lea.vmem %s5, %s423
        %p425 = scmp.lt.s32.totalorder %s29, 1
        %s426 = scalar_select %p425, %s29, 1
        %s427 = smul.addr %s426, 32
        %s428 = smul.addr %s427, 4
        %s429 = scalar_lea.vmem %s6, %s428
        %p431 = scmp.eq.s32.totalorder %s29, 0
        // Predicated region
        $region53: #{tpu_custom_call.1} parent=51 // pred_check
          %p432 = pneg %p431
        $region54: #{tpu_custom_call.1} parent=51 // pred_check_branch
          %434 = sbr.rel (%p432) target = $region56
        $region55: #{tpu_custom_call.1} parent=51 // pred_region
          %vm435 = vcmask 261120
          %436 = vst.msk [vmem:[#allocation2] sm:$0xff] %vm435, 0.0
        $region56: #{tpu_custom_call.1} parent=51 // pred_fallthru
          _
        %s437 = smul.u32 %s28, 8
        %s438 = sshra.s32 %s437, 3
        %s439 = sand.u32 %s437, 7
        %s440 = smul.addr %s438, 4
        %s441 = scalar_lea.vmem %s403, %s440
        %v442 = vld [vmem:[%s441] sm:$0xf]
        %v443 = vld [vmem:[%s411] sm:$0xff]
        %v444 = vld [vmem:[%s411 + $0x8] sm:$0xff]
        %v445 = vld [vmem:[%s411 + $0x10] sm:$0xff]
        %v446 = vld [vmem:[%s411 + $0x18] sm:$0xff]
        %v447 = vld [vmem:[%s415] sm:$0x3]
        %v449 = vlaneseq
        %v450 = vshrl.u32 %v449, 7
        %v451 = vsub.s32 0, %v450
        %v452 = vrot.slane %v447, %v451
        %v453 = vlaneseq
        %v454 = vshrl.u32 %v453, 7
        %v455 = vsub.s32 1, %v454
        %v456 = vrot.slane %v447, %v455
        %v463 = vunpack.c.l.b16 %v443
        %v464 = vunpack.c.h.b16 %v443
        %v465 = vunpack.c.l.b16 %v444
        %v466 = vunpack.c.h.b16 %v444
        %v467 = vunpack.c.l.b16 %v445
        %v468 = vunpack.c.h.b16 %v445
        %v469 = vunpack.c.l.b16 %v446
        %v470 = vunpack.c.h.b16 %v446
        %v471 = vpack.c.b16 %v465, %v463
        %v472 = vpack.c.b16 %v466, %v464
        %v473 = vpack.c.b16 %v469, %v467
        %v474 = vpack.c.b16 %v470, %v468
        %vm479 = vcmask 261120
        %v481 = vsel %vm479, %v442, 0
        %483 = vmatprep.subr.bf16.mxu0 %v472
        %484 = vmatpush1.bf16.msra.mxu0 %v471
        %485 = vmatprep.subr.bf16.mxu0 %v474
        %486 = vmatpush1.bf16.msra.mxu0 %v473
        %487 = vmatprep.subr.bf16.mxu0 0
        %488 = vmatpush1.bf16.msra.mxu0 0
        %489 = vmatprep.subr.bf16.mxu0 0
        %490 = vmatpush1.bf16.msra.mxu0 0
        %491 = vmatprep.subr.bf16.mxu0 0
        %492 = vmatpush1.bf16.msra.mxu0 0
        %493 = vmatprep.subr.bf16.mxu0 0
        %494 = vmatpush1.bf16.msra.mxu0 0
        %495 = vmatprep.subr.bf16.mxu0 0
        %496 = vmatpush1.bf16.msra.mxu0 0
        %497 = vmatprep.subr.bf16.mxu0 0
        %498 = vmatpush1.bf16.msra.mxu0 0
        %499 = vmatprep.subr.bf16.mxu0 0
        %500 = vmatpush1.bf16.msra.mxu0 0
        %501 = vmatprep.subr.bf16.mxu0 0
        %502 = vmatpush1.bf16.msra.mxu0 0
        %503 = vmatprep.subr.bf16.mxu0 0
        %504 = vmatpush1.bf16.msra.mxu0 0
        %505 = vmatprep.subr.bf16.mxu0 0
        %506 = vmatpush1.bf16.msra.mxu0 0
        %507 = vmatprep.subr.bf16.mxu0 0
        %508 = vmatpush1.bf16.msra.mxu0 0
        %509 = vmatprep.subr.bf16.mxu0 0
        %510 = vmatpush1.bf16.msra.mxu0 0
        %511 = vmatprep.subr.bf16.mxu0 0
        %512 = vmatpush1.bf16.msra.mxu0 0
        %513 = vmatprep.subr.bf16.mxu0 0
        %514 = vmatpush1.bf16.msra.mxu0 0
        %515 = vmatprep.mubr.bf16.mxu0 0
        %516 = vmatmul.mubr.bf16.gmra.mrb[0].mxu0 %v481
        %v517 = vpop.f32.mrb[0].mxu0
        %v518 = vadd.f32 %v452, %v517
        %v519 = vpop.f32.mrb[0].mxu0
        %v520 = vadd.f32 %v456, %v519
        %v521 = vpop.f32.mrb[0].mxu0
        %v522 = vpop.f32.mrb[0].mxu0
        %523 = vdwg.mxu0
        %v524 = vpack.c.bf16 %v518, %v518
        %v525 = vpack.c.bf16 %v520, %v520
        %v526 = vld [vmem:[%s403] sm:$0xf]
        %v527 = vld [vmem:[%s420] sm:$0xff]
        %v528 = vld [vmem:[%s420 + $0x8] sm:$0xff]
        %v529 = vld [vmem:[%s420 + $0x10] sm:$0xff]
        %v530 = vld [vmem:[%s420 + $0x18] sm:$0xff]
        %v531 = vld [vmem:[%s424] sm:$0x3]
        %v533 = vlaneseq
        %v534 = vshrl.u32 %v533, 7
        %v535 = vsub.s32 0, %v534
        %v536 = vrot.slane %v531, %v535
        %v537 = vlaneseq
        %v538 = vshrl.u32 %v537, 7
        %v539 = vsub.s32 1, %v538
        %v540 = vrot.slane %v531, %v539
        %v547 = vunpack.c.l.b16 %v527
        %v548 = vunpack.c.h.b16 %v527
        %v549 = vunpack.c.l.b16 %v528
        %v550 = vunpack.c.h.b16 %v528
        %v551 = vunpack.c.l.b16 %v529
        %v552 = vunpack.c.h.b16 %v529
        %v553 = vunpack.c.l.b16 %v530
        %v554 = vunpack.c.h.b16 %v530
        %v555 = vpack.c.b16 %v549, %v547
        %v556 = vpack.c.b16 %v550, %v548
        %v557 = vpack.c.b16 %v553, %v551
        %v558 = vpack.c.b16 %v554, %v552
        %v564 = vsel %vm479, %v526, 0
        %566 = vmatprep.subr.bf16.mxu0 %v556
        %567 = vmatpush1.bf16.msra.mxu0 %v555
        %568 = vmatprep.subr.bf16.mxu0 %v558
        %569 = vmatpush1.bf16.msra.mxu0 %v557
        %570 = vmatprep.subr.bf16.mxu0 0
        %571 = vmatpush1.bf16.msra.mxu0 0
        %572 = vmatprep.subr.bf16.mxu0 0
        %573 = vmatpush1.bf16.msra.mxu0 0
        %574 = vmatprep.subr.bf16.mxu0 0
        %575 = vmatpush1.bf16.msra.mxu0 0
        %576 = vmatprep.subr.bf16.mxu0 0
        %577 = vmatpush1.bf16.msra.mxu0 0
        %578 = vmatprep.subr.bf16.mxu0 0
        %579 = vmatpush1.bf16.msra.mxu0 0
        %580 = vmatprep.subr.bf16.mxu0 0
        %581 = vmatpush1.bf16.msra.mxu0 0
        %582 = vmatprep.subr.bf16.mxu0 0
        %583 = vmatpush1.bf16.msra.mxu0 0
        %584 = vmatprep.subr.bf16.mxu0 0
        %585 = vmatpush1.bf16.msra.mxu0 0
        %586 = vmatprep.subr.bf16.mxu0 0
        %587 = vmatpush1.bf16.msra.mxu0 0
        %588 = vmatprep.subr.bf16.mxu0 0
        %589 = vmatpush1.bf16.msra.mxu0 0
        %590 = vmatprep.subr.bf16.mxu0 0
        %591 = vmatpush1.bf16.msra.mxu0 0
        %592 = vmatprep.subr.bf16.mxu0 0
        %593 = vmatpush1.bf16.msra.mxu0 0
        %594 = vmatprep.subr.bf16.mxu0 0
        %595 = vmatpush1.bf16.msra.mxu0 0
        %596 = vmatprep.subr.bf16.mxu0 0
        %597 = vmatpush1.bf16.msra.mxu0 0
        %598 = vmatprep.mubr.bf16.mxu0 0
        %599 = vmatmul.mubr.bf16.gmra.mrb[0].mxu0 %v564
        %v600 = vpop.f32.mrb[0].mxu0
        %v601 = vadd.f32 %v536, %v600
        %v602 = vpop.f32.mrb[0].mxu0
        %v603 = vadd.f32 %v540, %v602
        %v604 = vpop.f32.mrb[0].mxu0
        %v605 = vpop.f32.mrb[0].mxu0
        %606 = vdwg.mxu0
        %v607 = vpack.c.bf16 %v601, %v601
        %v608 = vpack.c.bf16 %v603, %v603
        %v609 = vld [vmem:[%s406] sm:$0x1]
        %v611 = vlaneseq
        %v612 = vshrl.u32 %v611, 7
        %v613 = vsub.s32 0, %v612
        %v614 = vrot.slane %v609, %v613
        %616 = vmatprep.subr.bf16.mxu0 0
        %617 = vmatpush1.bf16.xpose.msra.mxu0 %v607
        %618 = vmatprep.subr.bf16.mxu0 0
        %619 = vmatpush1.bf16.xpose.msra.mxu0 0
        %620 = vmatprep.subr.bf16.mxu0 0
        %621 = vmatpush1.bf16.xpose.msra.mxu0 0
        %622 = vmatprep.subr.bf16.mxu0 0
        %623 = vmatpush1.bf16.xpose.msra.mxu0 0
        %624 = vmatprep.subr.bf16.mxu0 0
        %625 = vmatpush1.bf16.xpose.msra.mxu0 0
        %626 = vmatprep.subr.bf16.mxu0 0
        %627 = vmatpush1.bf16.xpose.msra.mxu0 0
        %628 = vmatprep.subr.bf16.mxu0 0
        %629 = vmatpush1.bf16.xpose.msra.mxu0 0
        %630 = vmatprep.subr.bf16.mxu0 0
        %631 = vmatpush1.bf16.xpose.msra.mxu0 0
        %632 = vmatprep.subr.bf16.mxu0 0
        %633 = vmatpush1.bf16.xpose.msra.mxu0 0
        %634 = vmatprep.subr.bf16.mxu0 0
        %635 = vmatpush1.bf16.xpose.msra.mxu0 0
        %636 = vmatprep.subr.bf16.mxu0 0
        %637 = vmatpush1.bf16.xpose.msra.mxu0 0
        %638 = vmatprep.subr.bf16.mxu0 0
        %639 = vmatpush1.bf16.xpose.msra.mxu0 0
        %640 = vmatprep.subr.bf16.mxu0 0
        %641 = vmatpush1.bf16.xpose.msra.mxu0 0
        %642 = vmatprep.subr.bf16.mxu0 0
        %643 = vmatpush1.bf16.xpose.msra.mxu0 0
        %644 = vmatprep.subr.bf16.mxu0 0
        %645 = vmatpush1.bf16.xpose.msra.mxu0 0
        %646 = vmatprep.subr.bf16.mxu0 0
        %647 = vmatpush1.bf16.xpose.msra.mxu0 0
        %648 = vmatprep.mubr.bf16.mxu0 0
        %649 = vmatmul.mubr.bf16.gmra.mrb[0].mxu0 %v524
        %v650 = vpop.f32.mrb[0].mxu0
        %v651 = vadd.f32 %v614, %v650
        %v652 = vpop.f32.mrb[0].mxu0
        %v653 = vpop.f32.mrb[0].mxu0
        %v654 = vpop.f32.mrb[0].mxu0
        %655 = vdwg.mxu0
        %vm656 = vcmask 64512
        %v657 = vsel %vm656, %v651, -inf
        %658 = vmax.xlane.f32.xlu0 %v657
        %v659 = vpop.xlane.xlu0 %658
        %v660 = vmax.f32 %v659, -1e+30
        %v661 = vsub.f32 -1e+30, %v660
        %v662 = vmul.f32 %v661, 1.442695
        %v663 = vpow.pop %v662
        %v664 = vsub.f32 %v651, %v660
        %v665 = vmul.f32 %v664, 1.442695
        %v666 = vpow.pop %v665
        %v667 = vmul.f32 %v663, 0.0
        %v668 = vsel %vm656, %v666, 0.0
        %669 = vadd.xlane.f32.xlu0 %v668
        %v670 = vpop.xlane.xlu0 %669
        %v671 = vadd.f32 %v667, %v670
        %v672 = vpack.c.bf16 %v666, %v666
        %v674 = vsel %vm656, %v672, 0
        %vm676 = vcmask 1043456
        %v678 = vsel %vm676, %v608, 0
        %680 = vmatprep.subr.bf16.mxu0 0
        %681 = vmatpush1.bf16.msra.mxu0 %v678
        %682 = vmatprep.subr.bf16.mxu0 0
        %683 = vmatpush1.bf16.msra.mxu0 0
        %684 = vmatprep.subr.bf16.mxu0 0
        %685 = vmatpush1.bf16.msra.mxu0 0
        %686 = vmatprep.subr.bf16.mxu0 0
        %687 = vmatpush1.bf16.msra.mxu0 0
        %688 = vmatprep.subr.bf16.mxu0 0
        %689 = vmatpush1.bf16.msra.mxu0 0
        %690 = vmatprep.subr.bf16.mxu0 0
        %691 = vmatpush1.bf16.msra.mxu0 0
        %692 = vmatprep.subr.bf16.mxu0 0
        %693 = vmatpush1.bf16.msra.mxu0 0
        %694 = vmatprep.subr.bf16.mxu0 0
        %695 = vmatpush1.bf16.msra.mxu0 0
        %696 = vmatprep.subr.bf16.mxu0 0
        %697 = vmatpush1.bf16.msra.mxu0 0
        %698 = vmatprep.subr.bf16.mxu0 0
        %699 = vmatpush1.bf16.msra.mxu0 0
        %700 = vmatprep.subr.bf16.mxu0 0
        %701 = vmatpush1.bf16.msra.mxu0 0
        %702 = vmatprep.subr.bf16.mxu0 0
        %703 = vmatpush1.bf16.msra.mxu0 0
        %704 = vmatprep.subr.bf16.mxu0 0
        %705 = vmatpush1.bf16.msra.mxu0 0
        %706 = vmatprep.subr.bf16.mxu0 0
        %707 = vmatpush1.bf16.msra.mxu0 0
        %708 = vmatprep.subr.bf16.mxu0 0
        %709 = vmatpush1.bf16.msra.mxu0 0
        %710 = vmatprep.subr.bf16.mxu0 0
        %711 = vmatpush1.bf16.msra.mxu0 0
        %712 = vmatprep.mubr.bf16.mxu0 0
        %713 = vmatmul.mubr.bf16.gmra.mrb[0].mxu0 %v674
        %v714 = vpop.f32.mrb[0].mxu0
        %v715 = vadd.f32 0.0, %v714
        %v716 = vpop.f32.mrb[0].mxu0
        %v717 = vpop.f32.mrb[0].mxu0
        %v718 = vpop.f32.mrb[0].mxu0
        %719 = vdwg.mxu0
        %v720 = vadd.f32 %v667, %v715
        %721 = vmatprep.subr.bf16.mxu0 0
        %722 = vmatpush1.bf16.xpose.msra.mxu0 %v607
        %723 = vmatprep.subr.bf16.mxu0 0
        %724 = vmatpush1.bf16.xpose.msra.mxu0 0
        %725 = vmatprep.subr.bf16.mxu0 0
        %726 = vmatpush1.bf16.xpose.msra.mxu0 0
        %727 = vmatprep.subr.bf16.mxu0 0
        %728 = vmatpush1.bf16.xpose.msra.mxu0 0
        %729 = vmatprep.subr.bf16.mxu0 0
        %730 = vmatpush1.bf16.xpose.msra.mxu0 0
        %731 = vmatprep.subr.bf16.mxu0 0
        %732 = vmatpush1.bf16.xpose.msra.mxu0 0
        %733 = vmatprep.subr.bf16.mxu0 0
        %734 = vmatpush1.bf16.xpose.msra.mxu0 0
        %735 = vmatprep.subr.bf16.mxu0 0
        %736 = vmatpush1.bf16.xpose.msra.mxu0 0
        %737 = vmatprep.subr.bf16.mxu0 0
        %738 = vmatpush1.bf16.xpose.msra.mxu0 0
        %739 = vmatprep.subr.bf16.mxu0 0
        %740 = vmatpush1.bf16.xpose.msra.mxu0 0
        %741 = vmatprep.subr.bf16.mxu0 0
        %742 = vmatpush1.bf16.xpose.msra.mxu0 0
        %743 = vmatprep.subr.bf16.mxu0 0
        %744 = vmatpush1.bf16.xpose.msra.mxu0 0
        %745 = vmatprep.subr.bf16.mxu0 0
        %746 = vmatpush1.bf16.xpose.msra.mxu0 0
        %747 = vmatprep.subr.bf16.mxu0 0
        %748 = vmatpush1.bf16.xpose.msra.mxu0 0
        %749 = vmatprep.subr.bf16.mxu0 0
        %750 = vmatpush1.bf16.xpose.msra.mxu0 0
        %751 = vmatprep.subr.bf16.mxu0 0
        %752 = vmatpush1.bf16.xpose.msra.mxu0 0
        %753 = vmatprep.mubr.bf16.mxu0 0
        %754 = vmatmul.mubr.bf16.gmra.mrb[0].mxu0 %v525
        %v755 = vpop.f32.mrb[0].mxu0
        %v756 = vadd.f32 %v614, %v755
        %v757 = vpop.f32.mrb[0].mxu0
        %v758 = vpop.f32.mrb[0].mxu0
        %v759 = vpop.f32.mrb[0].mxu0
        %760 = vdwg.mxu0
        %v761 = vsel %vm656, %v756, -inf
        %762 = vmax.xlane.f32.xlu0 %v761
        %v763 = vpop.xlane.xlu0 %762
        %v764 = vmax.f32 %v763, -1e+30
        %v765 = vsub.f32 -1e+30, %v764
        %v766 = vmul.f32 %v765, 1.442695
        %v767 = vpow.pop %v766
        %v768 = vsub.f32 %v756, %v764
        %v769 = vmul.f32 %v768, 1.442695
        %v770 = vpow.pop %v769
        %v771 = vmul.f32 %v767, 0.0
        %v772 = vsel %vm656, %v770, 0.0
        %773 = vadd.xlane.f32.xlu0 %v772
        %v774 = vpop.xlane.xlu0 %773
        %v775 = vadd.f32 %v771, %v774
        %v776 = vpack.c.bf16 %v770, %v770
        %v778 = vsel %vm656, %v776, 0
        %780 = vmatprep.subr.bf16.mxu0 0
        %781 = vmatpush1.bf16.msra.mxu0 %v678
        %782 = vmatprep.subr.bf16.mxu0 0
        %783 = vmatpush1.bf16.msra.mxu0 0
        %784 = vmatprep.subr.bf16.mxu0 0
        %785 = vmatpush1.bf16.msra.mxu0 0
        %786 = vmatprep.subr.bf16.mxu0 0
        %787 = vmatpush1.bf16.msra.mxu0 0
        %788 = vmatprep.subr.bf16.mxu0 0
        %789 = vmatpush1.bf16.msra.mxu0 0
        %790 = vmatprep.subr.bf16.mxu0 0
        %791 = vmatpush1.bf16.msra.mxu0 0
        %792 = vmatprep.subr.bf16.mxu0 0
        %793 = vmatpush1.bf16.msra.mxu0 0
        %794 = vmatprep.subr.bf16.mxu0 0
        %795 = vmatpush1.bf16.msra.mxu0 0
        %796 = vmatprep.subr.bf16.mxu0 0
        %797 = vmatpush1.bf16.msra.mxu0 0
        %798 = vmatprep.subr.bf16.mxu0 0
        %799 = vmatpush1.bf16.msra.mxu0 0
        %800 = vmatprep.subr.bf16.mxu0 0
        %801 = vmatpush1.bf16.msra.mxu0 0
        %802 = vmatprep.subr.bf16.mxu0 0
        %803 = vmatpush1.bf16.msra.mxu0 0
        %804 = vmatprep.subr.bf16.mxu0 0
        %805 = vmatpush1.bf16.msra.mxu0 0
        %806 = vmatprep.subr.bf16.mxu0 0
        %807 = vmatpush1.bf16.msra.mxu0 0
        %808 = vmatprep.subr.bf16.mxu0 0
        %809 = vmatpush1.bf16.msra.mxu0 0
        %810 = vmatprep.subr.bf16.mxu0 0
        %811 = vmatpush1.bf16.msra.mxu0 0
        %812 = vmatprep.mubr.bf16.mxu0 0
        %813 = vmatmul.mubr.bf16.gmra.mrb[0].mxu0 %v778
        %v814 = vpop.f32.mrb[0].mxu0
        %v815 = vadd.f32 0.0, %v814
        %v816 = vpop.f32.mrb[0].mxu0
        %v817 = vpop.f32.mrb[0].mxu0
        %v818 = vpop.f32.mrb[0].mxu0
        %819 = vdwg.mxu0
        %v820 = vadd.f32 %v771, %v815
        %v821 = vrcp.pop %v671
        %v822 = vmul.f32 %v720, %v821
        %v823 = vld [vmem:[#allocation2] sm:$0xff]
        %v824 = vpack.c.bf16 %v822, %v822
        %v825 = vld [vmem:[%s429] sm:$0xf]
        %v826 = vld [vmem:[%s429 + $0x4] sm:$0xf]
        %v827 = vld [vmem:[%s429 + $0x8] sm:$0xf]
        %v828 = vld [vmem:[%s429 + $0xc] sm:$0xf]
        %v829 = vld [vmem:[%s429 + $0x10] sm:$0xf]
        %v830 = vld [vmem:[%s429 + $0x14] sm:$0xf]
        %v831 = vld [vmem:[%s429 + $0x18] sm:$0xf]
        %v832 = vld [vmem:[%s429 + $0x1c] sm:$0xf]
        %v833 = vld [vmem:[%s429 + $0x20] sm:$0xf]
        %v834 = vld [vmem:[%s429 + $0x24] sm:$0xf]
        %v835 = vld [vmem:[%s429 + $0x28] sm:$0xf]
        %v836 = vld [vmem:[%s429 + $0x2c] sm:$0xf]
        %v837 = vld [vmem:[%s429 + $0x30] sm:$0xf]
        %v838 = vld [vmem:[%s429 + $0x34] sm:$0xf]
        %v839 = vld [vmem:[%s429 + $0x38] sm:$0xf]
        %v840 = vld [vmem:[%s429 + $0x3c] sm:$0xf]
        %v857 = vunpack.c.l.b16 %v825
        %v858 = vunpack.c.l.b16 %v826
        %v859 = vunpack.c.l.b16 %v827
        %v860 = vunpack.c.l.b16 %v828
        %v861 = vunpack.c.l.b16 %v829
        %v862 = vunpack.c.l.b16 %v830
        %v863 = vunpack.c.l.b16 %v831
        %v864 = vunpack.c.l.b16 %v832
        %v865 = vunpack.c.l.b16 %v833
        %v866 = vunpack.c.l.b16 %v834
        %v867 = vunpack.c.l.b16 %v835
        %v868 = vunpack.c.l.b16 %v836
        %v869 = vunpack.c.l.b16 %v837
        %v870 = vunpack.c.l.b16 %v838
        %v871 = vunpack.c.l.b16 %v839
        %v872 = vunpack.c.l.b16 %v840
        %v873 = vpack.c.b16 %v858, %v857
        %v874 = vpack.c.b16 %v860, %v859
        %v875 = vpack.c.b16 %v862, %v861
        %v876 = vpack.c.b16 %v864, %v863
        %v877 = vpack.c.b16 %v866, %v865
        %v878 = vpack.c.b16 %v868, %v867
        %v879 = vpack.c.b16 %v870, %v869
        %v880 = vpack.c.b16 %v872, %v871
        %889 = vmatprep.subr.bf16.mxu0 0
        %890 = vmatpush1.bf16.msra.mxu0 %v873
        %891 = vmatprep.subr.bf16.mxu0 0
        %892 = vmatpush1.bf16.msra.mxu0 %v874
        %893 = vmatprep.subr.bf16.mxu0 0
        %894 = vmatpush1.bf16.msra.mxu0 %v875
        %895 = vmatprep.subr.bf16.mxu0 0
        %896 = vmatpush1.bf16.msra.mxu0 %v876
        %897 = vmatprep.subr.bf16.mxu0 0
        %898 = vmatpush1.bf16.msra.mxu0 %v877
        %899 = vmatprep.subr.bf16.mxu0 0
        %900 = vmatpush1.bf16.msra.mxu0 %v878
        %901 = vmatprep.subr.bf16.mxu0 0
        %902 = vmatpush1.bf16.msra.mxu0 %v879
        %903 = vmatprep.subr.bf16.mxu0 0
        %904 = vmatpush1.bf16.msra.mxu0 %v880
        %905 = vmatprep.subr.bf16.mxu0 0
        %906 = vmatpush1.bf16.msra.mxu0 0
        %907 = vmatprep.subr.bf16.mxu0 0
        %908 = vmatpush1.bf16.msra.mxu0 0
        %909 = vmatprep.subr.bf16.mxu0 0
        %910 = vmatpush1.bf16.msra.mxu0 0
        %911 = vmatprep.subr.bf16.mxu0 0
        %912 = vmatpush1.bf16.msra.mxu0 0
        %913 = vmatprep.subr.bf16.mxu0 0
        %914 = vmatpush1.bf16.msra.mxu0 0
        %915 = vmatprep.subr.bf16.mxu0 0
        %916 = vmatpush1.bf16.msra.mxu0 0
        %917 = vmatprep.subr.bf16.mxu0 0
        %918 = vmatpush1.bf16.msra.mxu0 0
        %919 = vmatprep.subr.bf16.mxu0 0
        %920 = vmatpush1.bf16.msra.mxu0 0
        %921 = vmatprep.mubr.bf16.mxu0 0
        %922 = vmatmul.mubr.bf16.gmra.mrb[0].mxu0 %v824
        %v923 = vpop.f32.mrb[0].mxu0
        %v924 = vadd.f32 0.0, %v923
        %v925 = vpop.f32.mrb[0].mxu0
        %v926 = vpop.f32.mrb[0].mxu0
        %v927 = vpop.f32.mrb[0].mxu0
        %928 = vdwg.mxu0
        %v929 = vadd.f32 %v823, %v924
        %930 = vst.msk [vmem:[#allocation2] sm:$0xff] %vm479, %v929
        %v931 = vrcp.pop %v775
        %v932 = vmul.f32 %v820, %v931
        %v933 = vld [vmem:[#allocation2] sm:$0xff]
        %v934 = vpack.c.bf16 %v932, %v932
        %v935 = vld [vmem:[%s429 + $0x40] sm:$0xf]
        %v936 = vld [vmem:[%s429 + $0x44] sm:$0xf]
        %v937 = vld [vmem:[%s429 + $0x48] sm:$0xf]
        %v938 = vld [vmem:[%s429 + $0x4c] sm:$0xf]
        %v939 = vld [vmem:[%s429 + $0x50] sm:$0xf]
        %v940 = vld [vmem:[%s429 + $0x54] sm:$0xf]
        %v941 = vld [vmem:[%s429 + $0x58] sm:$0xf]
        %v942 = vld [vmem:[%s429 + $0x5c] sm:$0xf]
        %v943 = vld [vmem:[%s429 + $0x60] sm:$0xf]
        %v944 = vld [vmem:[%s429 + $0x64] sm:$0xf]
        %v945 = vld [vmem:[%s429 + $0x68] sm:$0xf]
        %v946 = vld [vmem:[%s429 + $0x6c] sm:$0xf]
        %v947 = vld [vmem:[%s429 + $0x70] sm:$0xf]
        %v948 = vld [vmem:[%s429 + $0x74] sm:$0xf]
        %v949 = vld [vmem:[%s429 + $0x78] sm:$0xf]
        %v950 = vld [vmem:[%s429 + $0x7c] sm:$0xf]
        %v967 = vunpack.c.l.b16 %v935
        %v968 = vunpack.c.l.b16 %v936
        %v969 = vunpack.c.l.b16 %v937
        %v970 = vunpack.c.l.b16 %v938
        %v971 = vunpack.c.l.b16 %v939
        %v972 = vunpack.c.l.b16 %v940
        %v973 = vunpack.c.l.b16 %v941
        %v974 = vunpack.c.l.b16 %v942
        %v975 = vunpack.c.l.b16 %v943
        %v976 = vunpack.c.l.b16 %v944
        %v977 = vunpack.c.l.b16 %v945
        %v978 = vunpack.c.l.b16 %v946
        %v979 = vunpack.c.l.b16 %v947
        %v980 = vunpack.c.l.b16 %v948
        %v981 = vunpack.c.l.b16 %v949
        %v982 = vunpack.c.l.b16 %v950
        %v983 = vpack.c.b16 %v968, %v967
        %v984 = vpack.c.b16 %v970, %v969
        %v985 = vpack.c.b16 %v972, %v971
        %v986 = vpack.c.b16 %v974, %v973
        %v987 = vpack.c.b16 %v976, %v975
        %v988 = vpack.c.b16 %v978, %v977
        %v989 = vpack.c.b16 %v980, %v979
        %v990 = vpack.c.b16 %v982, %v981
        %999 = vmatprep.subr.bf16.mxu0 0
        %1000 = vmatpush1.bf16.msra.mxu0 %v983
        %1001 = vmatprep.subr.bf16.mxu0 0
        %1002 = vmatpush1.bf16.msra.mxu0 %v984
        %1003 = vmatprep.subr.bf16.mxu0 0
        %1004 = vmatpush1.bf16.msra.mxu0 %v985
        %1005 = vmatprep.subr.bf16.mxu0 0
        %1006 = vmatpush1.bf16.msra.mxu0 %v986
        %1007 = vmatprep.subr.bf16.mxu0 0
        %1008 = vmatpush1.bf16.msra.mxu0 %v987
        %1009 = vmatprep.subr.bf16.mxu0 0
        %1010 = vmatpush1.bf16.msra.mxu0 %v988
        %1011 = vmatprep.subr.bf16.mxu0 0
        %1012 = vmatpush1.bf16.msra.mxu0 %v989
        %1013 = vmatprep.subr.bf16.mxu0 0
        %1014 = vmatpush1.bf16.msra.mxu0 %v990
        %1015 = vmatprep.subr.bf16.mxu0 0
        %1016 = vmatpush1.bf16.msra.mxu0 0
        %1017 = vmatprep.subr.bf16.mxu0 0
        %1018 = vmatpush1.bf16.msra.mxu0 0
        %1019 = vmatprep.subr.bf16.mxu0 0
        %1020 = vmatpush1.bf16.msra.mxu0 0
        %1021 = vmatprep.subr.bf16.mxu0 0
        %1022 = vmatpush1.bf16.msra.mxu0 0
        %1023 = vmatprep.subr.bf16.mxu0 0
        %1024 = vmatpush1.bf16.msra.mxu0 0
        %1025 = vmatprep.subr.bf16.mxu0 0
        %1026 = vmatpush1.bf16.msra.mxu0 0
        %1027 = vmatprep.subr.bf16.mxu0 0
        %1028 = vmatpush1.bf16.msra.mxu0 0
        %1029 = vmatprep.subr.bf16.mxu0 0
        %1030 = vmatpush1.bf16.msra.mxu0 0
        %1031 = vmatprep.mubr.bf16.mxu0 0
        %1032 = vmatmul.mubr.bf16.gmra.mrb[0].mxu0 %v934
        %v1033 = vpop.f32.mrb[0].mxu0
        %v1034 = vadd.f32 0.0, %v1033
        %v1035 = vpop.f32.mrb[0].mxu0
        %v1036 = vpop.f32.mrb[0].mxu0
        %v1037 = vpop.f32.mrb[0].mxu0
        %1038 = vdwg.mxu0
        %v1039 = vadd.f32 %v933, %v1034
        %1040 = vst.msk [vmem:[#allocation2] sm:$0xff] %vm479, %v1039
        %p1041 = scmp.eq.s32.totalorder %s29, 1
        // Predicated region
        $region57: #{tpu_custom_call.1} parent=51 // pred_check
          %p1042 = pneg %p1041
        $region58: #{tpu_custom_call.1} parent=51 // pred_check_branch
          %1044 = sbr.rel (%p1042) target = $region60
        $region59: #{tpu_custom_call.1} parent=51 // pred_region
          %v1045 = vld [vmem:[#allocation2] sm:$0xff]
          %v1046 = vld [vmem:[%s7] sm:$0x1]
          %v1048 = vlaneseq
          %v1049 = vshrl.u32 %v1048, 7
          %v1050 = vsub.s32 0, %v1049
          %v1051 = vrot.slane %v1046, %v1050
          %v1053 = vadd.f32 %v1045, %v1051
          %1054 = vst.msk [vmem:[%s399] sm:$0xff] %vm479, %v1053
        $region60: #{tpu_custom_call.1} parent=51 // pred_fallthru
          _
        %s1055 = sand.u32 %s254, 1
        %s1056 = scalar_lea.sflag [#allocation4], %s1055
        %s1057 = sand.u32 %s254, 1
        %s1058 = smul.addr %s1057, 8
        %s1059 = scalar_lea.vmem [#allocation3], %s1058
        // Predicated region
        $region61: #{tpu_custom_call.1} parent=51 // pred_check
          %p1060 = pneg %p264
        $region62: #{tpu_custom_call.1} parent=51 // pred_check_branch
          %1062 = sbr.rel (%p1060) target = $region64
        $region63: #{tpu_custom_call.1} parent=51 // pred_region
          %s1064 = ssub.s32 128, 128
          %1065 = vsyncadd %s1056, %s1064
          %s1066 = sadd.s32 %s28, %s27
          %s1067 = smul.addr %s1066, 128
          %s1068 = scalar_lea.hbm %s8, %s1067
          %s1070 = sshll.u32 %s1059, 4
          %s1071 = int_to_ptr.vmem [resolvable:$true] %s1070
          %1073 = dma.vmem_to_hbm [thread:$0]  %s1071, 128, %s1068, %s1056
        $region64: #{tpu_custom_call.1} parent=51 // pred_fallthru
          _
      $region52: #{tpu_custom_call.1} parent=5 // pred_fallthru
        _
      %p1074 = scmp.le.s32.totalorder 2, %s17
      // Predicated region
      $region65: #{tpu_custom_call.1} parent=5 // pred_check
        %p1075 = pneg %p1074
      $region66: #{tpu_custom_call.1} parent=5 // pred_check_branch
        %1077 = sbr.rel (%p1075) target = $region68
      $region67: #{tpu_custom_call.1} parent=5 // pred_region
        %s1078 = ssub.s32 %s17, 2
        // Predicated region
        $region69: #{tpu_custom_call.1} parent=67 // pred_check
          %p1079 = pneg %p270
        $region70: #{tpu_custom_call.1} parent=67 // pred_check_branch
          %1081 = sbr.rel (%p1079) target = $region72
        $region71: #{tpu_custom_call.1} parent=67 // pred_region
          %s1082 = sand.u32 %s255, 1
          %s1083 = scalar_lea.sflag [#allocation4], %s1082
          %s1084 = sand.u32 %s255, 1
          %s1085 = smul.addr %s1084, 8
          %s1086 = scalar_lea.vmem [#allocation3], %s1085
          %1087 = dma.done %s1083, 128
        $region72: #{tpu_custom_call.1} parent=67 // pred_fallthru
          _
      $region68: #{tpu_custom_call.1} parent=5 // pred_fallthru
        _
    $region6: #{tpu_custom_call.1} parent=1 // loop_footer
      %s21 = sadd.s32 1, %s17
    $region7: #{tpu_custom_call.1} parent=1 // loop_footer_branch
      %16 = sbr.rel target = $region3
    $region8: #{tpu_custom_call.1} parent=1 // loop_exit
      _
    %1088 = vsyncpa [#allocation4], 1
    %s1089 = scalar_lea.sflag [#allocation4], 1
    %1090 = vsyncpa %s1089, 1

</llo_original>
